<compile_context>
chip_gen: v5e
topology: v5e:2x2
jax: 0.10.0
libtpu: 0.0.40
codegen_flags: <defaults>
</compile_context>

<pallas_src>
import functools

import jax
import jax.numpy as jnp
from jax.experimental import pallas as pl
from jax.experimental.pallas import tpu as pltpu


def _round_up(v, m):
    return (v + m - 1) // m * m


def _cdiv(a, b):
    return (a + b - 1) // b


def _vmem_capacity_bytes():
    try:
        return int(pltpu.get_tpu_info().vmem_capacity_bytes)
    except Exception:
        return 64 << 20          # conservative default (v7x per-TC VMEM)


def _pad_features(d):
    dp = _round_up(d, 128)
    # Large D: pad the contraction dim to the 256 cadence of the v6e/v7x 256x256 MXU.
    if dp >= 1024 and dp % 256 != 0:
        dp += 128
    return dp


def _highway_kernel(*refs, col_tiled):
    """One (tm, fc) output tile of  out = x + sigmoid(x@Wt + bt) * (relu(x@Wh + bh) - x)."""
    if col_tiled:
        x_ref, xr_ref, w_ref, b_ref, o_ref = refs
    else:
        x_ref, w_ref, b_ref, o_ref = refs
        xr_ref = None

    x = x_ref[...]                                   # (tm, dp) native dtype -> MXU
    h = jnp.dot(x, w_ref[0], preferred_element_type=jnp.float32) + b_ref[0]
    h = jnp.maximum(h, 0.0)                          # ReLU branch
    t = jnp.dot(x, w_ref[1], preferred_element_type=jnp.float32) + b_ref[1]
    t = jax.nn.sigmoid(t)                            # gate branch (EUP)

    xr = (xr_ref[...] if col_tiled else x).astype(jnp.float32)
    # h*t + x*(1-t) == x + t*(h - x): one fewer multiply / temp in the epilogue.
    o_ref[...] = (xr + t * (h - xr)).astype(o_ref.dtype)


def make_highway_params(wh, bh, wt, bt, *, param_dtype=None):
    """Fuse + pad the two Linear layers once (hoisted out of the per-call path).

    wh, wt: (D, D) in PyTorch nn.Linear (out, in) layout.  bh, bt: (D,).
    Returns (w_fused, b_fused, d):
      w_fused: (2, dp, dp)  [0] = Wh^T, [1] = Wt^T, zero padded to dp lanes
      b_fused: (2, 1, dp)   float32
    """
    d = wh.shape[0]
    dp = _pad_features(d)

    def padw(w):
        return jnp.pad(w.T, ((0, dp - d), (0, dp - d)))

    w_fused = jnp.stack([padw(wh), padw(wt)])
    if param_dtype is not None:                      # e.g. bf16 weights if the model allows
        w_fused = w_fused.astype(param_dtype)
    b_fused = jnp.stack([jnp.pad(bh, (0, dp - d)),
                         jnp.pad(bt, (0, dp - d))]).astype(jnp.float32).reshape(2, 1, dp)
    return w_fused, b_fused, d


def highway_apply(x, w_fused, b_fused, d, *, tm_cap=None, weight_vmem_budget=None,
                  vmem_cap=None):
    """Highway forward.  x: (B, S, D) or (N, D)."""
    orig_shape = x.shape
    x2d = x.reshape(-1, orig_shape[-1]) if x.ndim > 2 else x
    n = x2d.shape[0]
    dp = w_fused.shape[-1]
    x_isize = x2d.dtype.itemsize
    w_isize = w_fused.dtype.itemsize

    if vmem_cap is None:
        vmem_cap = _vmem_capacity_bytes()
    if weight_vmem_budget is None:
        weight_vmem_budget = int(0.40 * vmem_cap)

    # ---- column (output-feature) tiling: keep the weight under the VMEM budget ----
    m = dp // 128
    n_col = m
    for c in range(1, m + 1):
        if m % c:
            continue
        bufs = 1 if c == 1 else 2            # resident weight is single-buffered
        if bufs * 2 * dp * (dp // c) * w_isize <= weight_vmem_budget:
            n_col = c
            break
    fc = dp // n_col
    col_tiled = n_col > 1
    w_bufs = 2 if col_tiled else 1

    # ---- row tiling: as big as the remaining VMEM allows ----
    resident = w_bufs * (2 * dp * fc * w_isize + 2 * fc * 4)
    per_row = (2 * dp + 2 * fc) * x_isize + (2 * fc + dp) * 4   # x/out dbl-buffers + f32 temps
    if col_tiled:
        per_row += 2 * fc * x_isize                             # residual x column tile
    stream_budget = max(vmem_cap - resident - (8 << 20), per_row * 8)
    if tm_cap is None:
        tm_cap = 1024 if vmem_cap >= (96 << 20) else 512        # v5e/v6e vs v7x
    tm_cap = max(8, min(_round_up(tm_cap, 8), stream_budget // per_row // 8 * 8))

    n8 = _round_up(max(n, 1), 8)             # pad rows only to the sublane multiple
    num_row = max(1, _cdiv(n8, tm_cap))
    if num_row == 1 and n8 >= 256:
        num_row = 2                          # keep the 2nd TensorCore busy (v7x megacore)
    tm = _round_up(_cdiv(n8, num_row), 8)
    n_pad = tm * num_row

    x_pad = x2d
    if n_pad != n or dp != x2d.shape[1]:
        x_pad = jnp.pad(x2d, ((0, n_pad - n), (0, dp - x2d.shape[1])))

    # ---- explicit VMEM limit sized from the actual buffers (+ headroom) ----
    need = (resident
            + 2 * tm * dp * x_isize                         # x tiles (double-buffered)
            + 2 * tm * fc * x_isize                         # out tiles (double-buffered)
            + (2 * tm * fc * x_isize if col_tiled else 0)   # residual x column tiles
            + tm * (2 * fc + dp) * 4)                       # h, t, x_f32 intermediates
    vmem_limit = int(min(max(need * 1.3 + (4 << 20), 16 << 20), vmem_cap))

    cost = pl.CostEstimate(
        flops=4 * n_pad * dp * dp,
        transcendentals=n_pad * dp,
        bytes_accessed=(x_pad.size * x_isize + w_fused.size * w_isize
                        + b_fused.size * 4 + n_pad * dp * x_isize),
    )

    def call(w_mode):
        kw = {} if w_mode is None else {"pipeline_mode": w_mode}
        in_specs = [pl.BlockSpec((tm, dp), lambda j, i: (i, 0))]       # streamed x rows
        operands = [x_pad]
        if col_tiled:
            # Matched x column tile for the residual mix (avoids in-kernel lane slicing).
            in_specs.append(pl.BlockSpec((tm, fc), lambda j, i: (i, j)))
            operands.append(x_pad)
        in_specs += [
            pl.BlockSpec((2, dp, fc), lambda j, i: (0, 0, j), **kw),   # fused weight
            pl.BlockSpec((2, 1, fc), lambda j, i: (0, 0, j), **kw),    # fused bias
        ]
        operands += [w_fused, b_fused]
        return pl.pallas_call(
            functools.partial(_highway_kernel, col_tiled=col_tiled),
            out_shape=jax.ShapeDtypeStruct((n_pad, dp), x2d.dtype),
            grid=(n_col, num_row),          # cols major -> weight streamed ~once when tiled
            in_specs=in_specs,
            out_specs=pl.BlockSpec((tm, fc), lambda j, i: (i, j)),
            compiler_params=pltpu.CompilerParams(
                dimension_semantics=("parallel", "parallel"),
                vmem_limit_bytes=vmem_limit,
            ),
            cost_estimate=cost,
        )(*operands)

    if col_tiled:
        out = call(None)                     # tiled weight: keep default double buffering
    else:
        try:
            out = call(pl.Buffered(1))       # resident weight/bias: single buffer, DMA'd once
        except Exception:
            out = call(None)                 # graceful fallback if pipeline_mode unsupported

    out = out[:n, :d]
    if x.ndim > 2:
        return out.reshape(*orig_shape[:-1], d)
    return out


def highway_forward(x, wh, bh, wt, bt, **kwargs):
    """One-shot convenience wrapper (prefer make_highway_params + highway_apply under jit)."""
    w_fused, b_fused, d = make_highway_params(wh, bh, wt, bt)
    return highway_apply(x, w_fused, b_fused, d, **kwargs)


if __name__ == "__main__":
    def xavier_normal(k, shape):
        fan_out, fan_in = shape
        std = (2.0 / (fan_in + fan_out)) ** 0.5
        return std * jax.random.normal(k, shape, dtype=jnp.float32)

    def reference(x, wh, bh, wt, bt):
        x2d = x.reshape(-1, x.shape[-1])
        h = jnp.maximum(x2d @ wh.T + bh, 0.0)
        t = jax.nn.sigmoid(x2d @ wt.T + bt)
        return (h * t + x2d * (1.0 - t)).reshape(x.shape)

    # --- test 1: small shapes matching the module (B, S, D) = (2, 8, 32) ---
    key = jax.random.PRNGKey(0)
    B, S, D = 2, 8, 32
    k_x, k_wh, k_bh, k_wt, k_bt = jax.random.split(key, 5)
    x = jax.random.normal(k_x, (B, S, D), dtype=jnp.float32)
    wh = xavier_normal(k_wh, (D, D))
    wt = xavier_normal(k_wt, (D, D))
    bound = 1.0 / (D ** 0.5)
    bh = jax.random.uniform(k_bh, (D,), minval=-bound, maxval=bound, dtype=jnp.float32)
    bt = jax.random.uniform(k_bt, (D,), minval=-bound, maxval=bound, dtype=jnp.float32)

    w_fused, b_fused, d = make_highway_params(wh, bh, wt, bt)
    out = jax.block_until_ready(highway_apply(x, w_fused, b_fused, d))
    ref = reference(x, wh, bh, wt, bt)
    assert out.shape == ref.shape
    assert jnp.allclose(out, ref, atol=2e-5, rtol=2e-5), "mismatch (resident-weight path)"

    # --- test 2: exercise row tiling + the column-tiled (large-weight) fallback path
    #     with artificially small budgets so it runs at test-friendly sizes. ---
    B2, S2, D2 = 4, 65, 500                  # N = 260 (awkward), D=500 -> dp=512
    k2 = jax.random.PRNGKey(1)
    k_x2, k_wh2, k_bh2, k_wt2, k_bt2 = jax.random.split(k2, 5)
    x2 = jax.random.normal(k_x2, (B2, S2, D2), dtype=jnp.float32)
    wh2 = xavier_normal(k_wh2, (D2, D2))
    wt2 = xavier_normal(k_wt2, (D2, D2))
    bound2 = 1.0 / (D2 ** 0.5)
    bh2 = jax.random.uniform(k_bh2, (D2,), minval=-bound2, maxval=bound2, dtype=jnp.float32)
    bt2 = jax.random.uniform(k_bt2, (D2,), minval=-bound2, maxval=bound2, dtype=jnp.float32)

    wf2, bf2, d2 = make_highway_params(wh2, bh2, wt2, bt2)
    out2 = jax.block_until_ready(
        highway_apply(x2, wf2, bf2, d2, tm_cap=128, weight_vmem_budget=1 << 20))
    ref2 = reference(x2, wh2, bh2, wt2, bt2)
    # Looser tolerance: default (non-HIGHEST) MXU matmul precision on both sides.
    assert jnp.allclose(out2, ref2, atol=1e-3, rtol=1e-3), "mismatch (column-tiled path)"

    print("KERNEL_OK")
</pallas_src>

<mosaic_0001>
module attributes {stable_mosaic.version = 11 : i64} {
  func.func @_highway_kernel(%arg0: i32, %arg1: i32, %arg2: memref<16x128xf32, #tpu.memory_space<vmem>>, %arg3: memref<2x128x128xf32, #tpu.memory_space<vmem>>, %arg4: memref<2x1x128xf32, #tpu.memory_space<vmem>>, %arg5: memref<16x128xf32, #tpu.memory_space<vmem>>) attributes {dimension_semantics = [#tpu.dimension_semantics<parallel>, #tpu.dimension_semantics<parallel>], iteration_bounds = array<i64: 1, 1>, scalar_prefetch = 0 : i64, scratch_operands = 0 : i64, tpu.core_type = #tpu.core_type<tc>, window_params = [{transform_indices = @transform_0, window_bounds = array<i64: 16, 128>}, {pipeline_mode = #tpu.pipeline_mode<synchronous>, transform_indices = @transform_1, window_bounds = array<i64: 2, 128, 128>}, {pipeline_mode = #tpu.pipeline_mode<synchronous>, transform_indices = @transform_2, window_bounds = array<i64: 2, 1, 128>}, {transform_indices = @transform_3, window_bounds = array<i64: 16, 128>}]} {
    %c0 = arith.constant 0 : index
    %c0_0 = arith.constant 0 : index
    %0 = vector.load %arg2[%c0, %c0_0] : memref<16x128xf32, #tpu.memory_space<vmem>>, vector<16x128xf32>
    %c0_1 = arith.constant 0 : index
    %c0_2 = arith.constant 0 : index
    %c0_3 = arith.constant 0 : index
    %1 = vector.load %arg3[%c0_1, %c0_2, %c0_3] : memref<2x128x128xf32, #tpu.memory_space<vmem>>, vector<1x128x128xf32>
    %2 = vector.shape_cast %1 : vector<1x128x128xf32> to vector<128x128xf32>
    %cst = arith.constant dense<0.000000e+00> : vector<16x128xf32>
    %3 = tpu.matmul %0, %2, %cst {dimension_numbers = #tpu.dot_dimension_numbers<[1], [0], [0], [1], [0, 0, 1, 1], [], []>} : vector<16x128xf32>, vector<128x128xf32>, vector<16x128xf32> -> vector<16x128xf32>
    %c0_4 = arith.constant 0 : index
    %c0_5 = arith.constant 0 : index
    %c0_6 = arith.constant 0 : index
    %4 = vector.load %arg4[%c0_4, %c0_5, %c0_6] : memref<2x1x128xf32, #tpu.memory_space<vmem>>, vector<1x1x128xf32>
    %5 = vector.shape_cast %4 : vector<1x1x128xf32> to vector<1x128xf32>
    %6 = vector.broadcast %5 : vector<1x128xf32> to vector<16x128xf32>
    %7 = arith.addf %3, %6 : vector<16x128xf32>
    %cst_7 = arith.constant 0.000000e+00 : f32
    %8 = vector.broadcast %cst_7 : f32 to vector<16x128xf32>
    %9 = arith.maximumf %7, %8 : vector<16x128xf32>
    %c1 = arith.constant 1 : index
    %c0_8 = arith.constant 0 : index
    %c0_9 = arith.constant 0 : index
    %10 = vector.load %arg3[%c1, %c0_8, %c0_9] : memref<2x128x128xf32, #tpu.memory_space<vmem>>, vector<1x128x128xf32>
    %11 = vector.shape_cast %10 : vector<1x128x128xf32> to vector<128x128xf32>
    %cst_10 = arith.constant dense<0.000000e+00> : vector<16x128xf32>
    %12 = tpu.matmul %0, %11, %cst_10 {dimension_numbers = #tpu.dot_dimension_numbers<[1], [0], [0], [1], [0, 0, 1, 1], [], []>} : vector<16x128xf32>, vector<128x128xf32>, vector<16x128xf32> -> vector<16x128xf32>
    %c1_11 = arith.constant 1 : index
    %c0_12 = arith.constant 0 : index
    %c0_13 = arith.constant 0 : index
    %13 = vector.load %arg4[%c1_11, %c0_12, %c0_13] : memref<2x1x128xf32, #tpu.memory_space<vmem>>, vector<1x1x128xf32>
    %14 = vector.shape_cast %13 : vector<1x1x128xf32> to vector<1x128xf32>
    %15 = vector.broadcast %14 : vector<1x128xf32> to vector<16x128xf32>
    %16 = arith.addf %12, %15 : vector<16x128xf32>
    %17 = arith.negf %16 : vector<16x128xf32>
    %18 = math.exp %17 : vector<16x128xf32>
    %cst_14 = arith.constant 1.000000e+00 : f32
    %19 = vector.broadcast %cst_14 : f32 to vector<16x128xf32>
    %20 = arith.addf %19, %18 : vector<16x128xf32>
    %21 = arith.divf %19, %20 : vector<16x128xf32>
    %22 = arith.subf %9, %0 : vector<16x128xf32>
    %23 = arith.mulf %21, %22 : vector<16x128xf32>
    %24 = arith.addf %0, %23 : vector<16x128xf32>
    %c0_15 = arith.constant 0 : index
    %c0_16 = arith.constant 0 : index
    %25 = vector.load %arg5[%c0_15, %c0_16] : memref<16x128xf32, #tpu.memory_space<vmem>>, vector<16x128xf32>
    tpu.vector_store %arg5[%c0_15, %c0_16], %24 {strides = array<i32>} : memref<16x128xf32, #tpu.memory_space<vmem>>, vector<16x128xf32>,
    return
  }
  func.func @transform_0(%arg0: i32, %arg1: i32) -> (i32, i32) {
    %c0_i32 = arith.constant 0 : i32
    %c0_i32_0 = arith.constant 0 : i32
    return %arg1, %c0_i32 : i32, i32
  }
  func.func @transform_1(%arg0: i32, %arg1: i32) -> (i32, i32, i32) {
    %c0_i32 = arith.constant 0 : i32
    %c0_i32_0 = arith.constant 0 : i32
    %c0_i32_1 = arith.constant 0 : i32
    return %c0_i32, %c0_i32_0, %arg0 : i32, i32, i32
  }
  func.func @transform_2(%arg0: i32, %arg1: i32) -> (i32, i32, i32) {
    %c0_i32 = arith.constant 0 : i32
    %c0_i32_0 = arith.constant 0 : i32
    %c0_i32_1 = arith.constant 0 : i32
    return %c0_i32, %c0_i32_0, %arg0 : i32, i32, i32
  }
  func.func @transform_3(%arg0: i32, %arg1: i32) -> (i32, i32) {
    %c0_i32 = arith.constant 0 : i32
    return %arg1, %arg0 : i32, i32
  }
}

module attributes {stable_mosaic.version = 11 : i64} {
  func.func @_highway_kernel(%arg0: i32, %arg1: i32, %arg2: memref<16x128xf32, #tpu.memory_space<vmem>>, %arg3: memref<2x128x128xf32, #tpu.memory_space<vmem>>, %arg4: memref<2x1x128xf32, #tpu.memory_space<vmem>>, %arg5: memref<16x128xf32, #tpu.memory_space<vmem>>) attributes {dimension_semantics = [#tpu.dimension_semantics<parallel>, #tpu.dimension_semantics<parallel>], iteration_bounds = array<i64: 1, 1>, scalar_prefetch = 0 : i64, scratch_operands = 0 : i64, tpu.core_type = #tpu.core_type<tc>, window_params = [{transform_indices = @transform_0, window_bounds = array<i64: 16, 128>}, {transform_indices = @transform_1, window_bounds = array<i64: 2, 128, 128>}, {transform_indices = @transform_2, window_bounds = array<i64: 2, 1, 128>}, {transform_indices = @transform_3, window_bounds = array<i64: 16, 128>}]} {
    %c0 = arith.constant 0 : index
    %c0_0 = arith.constant 0 : index
    %0 = vector.load %arg2[%c0, %c0_0] : memref<16x128xf32, #tpu.memory_space<vmem>>, vector<16x128xf32>
    %c0_1 = arith.constant 0 : index
    %c0_2 = arith.constant 0 : index
    %c0_3 = arith.constant 0 : index
    %1 = vector.load %arg3[%c0_1, %c0_2, %c0_3] : memref<2x128x128xf32, #tpu.memory_space<vmem>>, vector<1x128x128xf32>
    %2 = vector.shape_cast %1 : vector<1x128x128xf32> to vector<128x128xf32>
    %cst = arith.constant dense<0.000000e+00> : vector<16x128xf32>
    %3 = tpu.matmul %0, %2, %cst {dimension_numbers = #tpu.dot_dimension_numbers<[1], [0], [0], [1], [0, 0, 1, 1], [], []>} : vector<16x128xf32>, vector<128x128xf32>, vector<16x128xf32> -> vector<16x128xf32>
    %c0_4 = arith.constant 0 : index
    %c0_5 = arith.constant 0 : index
    %c0_6 = arith.constant 0 : index
    %4 = vector.load %arg4[%c0_4, %c0_5, %c0_6] : memref<2x1x128xf32, #tpu.memory_space<vmem>>, vector<1x1x128xf32>
    %5 = vector.shape_cast %4 : vector<1x1x128xf32> to vector<1x128xf32>
    %6 = vector.broadcast %5 : vector<1x128xf32> to vector<16x128xf32>
    %7 = arith.addf %3, %6 : vector<16x128xf32>
    %cst_7 = arith.constant 0.000000e+00 : f32
    %8 = vector.broadcast %cst_7 : f32 to vector<16x128xf32>
    %9 = arith.maximumf %7, %8 : vector<16x128xf32>
    %c1 = arith.constant 1 : index
    %c0_8 = arith.constant 0 : index
    %c0_9 = arith.constant 0 : index
    %10 = vector.load %arg3[%c1, %c0_8, %c0_9] : memref<2x128x128xf32, #tpu.memory_space<vmem>>, vector<1x128x128xf32>
    %11 = vector.shape_cast %10 : vector<1x128x128xf32> to vector<128x128xf32>
    %cst_10 = arith.constant dense<0.000000e+00> : vector<16x128xf32>
    %12 = tpu.matmul %0, %11, %cst_10 {dimension_numbers = #tpu.dot_dimension_numbers<[1], [0], [0], [1], [0, 0, 1, 1], [], []>} : vector<16x128xf32>, vector<128x128xf32>, vector<16x128xf32> -> vector<16x128xf32>
    %c1_11 = arith.constant 1 : index
    %c0_12 = arith.constant 0 : index
    %c0_13 = arith.constant 0 : index
    %13 = vector.load %arg4[%c1_11, %c0_12, %c0_13] : memref<2x1x128xf32, #tpu.memory_space<vmem>>, vector<1x1x128xf32>
    %14 = vector.shape_cast %13 : vector<1x1x128xf32> to vector<1x128xf32>
    %15 = vector.broadcast %14 : vector<1x128xf32> to vector<16x128xf32>
    %16 = arith.addf %12, %15 : vector<16x128xf32>
    %17 = arith.negf %16 : vector<16x128xf32>
    %18 = math.exp %17 : vector<16x128xf32>
    %cst_14 = arith.constant 1.000000e+00 : f32
    %19 = vector.broadcast %cst_14 : f32 to vector<16x128xf32>
    %20 = arith.addf %19, %18 : vector<16x128xf32>
    %21 = arith.divf %19, %20 : vector<16x128xf32>
    %22 = arith.subf %9, %0 : vector<16x128xf32>
    %23 = arith.mulf %21, %22 : vector<16x128xf32>
    %24 = arith.addf %0, %23 : vector<16x128xf32>
    %c0_15 = arith.constant 0 : index
    %c0_16 = arith.constant 0 : index
    %25 = vector.load %arg5[%c0_15, %c0_16] : memref<16x128xf32, #tpu.memory_space<vmem>>, vector<16x128xf32>
    tpu.vector_store %arg5[%c0_15, %c0_16], %24 {strides = array<i32>} : memref<16x128xf32, #tpu.memory_space<vmem>>, vector<16x128xf32>,
    return
  }
  func.func @transform_0(%arg0: i32, %arg1: i32) -> (i32, i32) {
    %c0_i32 = arith.constant 0 : i32
    %c0_i32_0 = arith.constant 0 : i32
    return %arg1, %c0_i32 : i32, i32
  }
  func.func @transform_1(%arg0: i32, %arg1: i32) -> (i32, i32, i32) {
    %c0_i32 = arith.constant 0 : i32
    %c0_i32_0 = arith.constant 0 : i32
    %c0_i32_1 = arith.constant 0 : i32
    return %c0_i32, %c0_i32_0, %arg0 : i32, i32, i32
  }
  func.func @transform_2(%arg0: i32, %arg1: i32) -> (i32, i32, i32) {
    %c0_i32 = arith.constant 0 : i32
    %c0_i32_0 = arith.constant 0 : i32
    %c0_i32_1 = arith.constant 0 : i32
    return %c0_i32, %c0_i32_0, %arg0 : i32, i32, i32
  }
  func.func @transform_3(%arg0: i32, %arg1: i32) -> (i32, i32) {
    %c0_i32 = arith.constant 0 : i32
    return %arg1, %arg0 : i32, i32
  }
}

</mosaic_0001>

<llo_original>
// kernel: tpu_custom_call.1
$region0: #{tpu_custom_call.1}
  #allocation0 [shape = 'u32[]', space=smem, size = 0x4, offset = 0x4, fixed_abs, tag = 'smem constant byte address 0x4 - core index']
  #allocation1 [shape = 'u32[72,128]{1,0:T(1,128)}', space=vmem, size = 0x9000, scoped, tag = 'internal scratch']
  %s0 = inlined_call_operand.hbm [shape: f32[16,128], index: 0, kind: input, shape index: {}]
  %s1 = inlined_call_operand.hbm [shape: f32[2,128,128], index: 1, kind: input, shape index: {}]
  %s2 = inlined_call_operand.hbm [shape: f32[2,1,128], index: 2, kind: input, shape index: {}]
  %s3 = inlined_call_operand.hbm [shape: f32[16,128], index: 3, kind: output, shape index: {}]
  %s4 = sld [smem:[#allocation0]]
  $region34: #{tpu_custom_call.1} parent=0
    _
  %s6 = ssub.s32 1, %s4
  %s7 = scalar_select 0, %s6, %s4
  $region1: #{tpu_custom_call.1} parent=0
    #allocation2 [shape = 'u8[8192]{0}', space=vmem, size = 0x2000, scoped, tag = 'input window, operand 0, single buffered']
    #allocation3 [shape = 's32[1]{0}', space=sflag, size = 0x4, scoped, tag = 'scoped memory for tpu_custom_call.1']
    #allocation4 [shape = 's32[1]{0}', space=sflag, size = 0x4, scoped, tag = 'scoped memory for tpu_custom_call.1']
    #allocation5 [shape = 'u8[131072]{0}', space=vmem, size = 0x20000, scoped, tag = 'input window, operand 1, single buffered']
    #allocation6 [shape = 's32[1]{0}', space=sflag, size = 0x4, scoped, tag = 'scoped memory for tpu_custom_call.1']
    #allocation7 [shape = 'u8[1024]{0}', space=vmem, size = 0x400, scoped, tag = 'input window, operand 2, single buffered']
    #allocation8 [shape = 'u8[8192]{0}', space=vmem, size = 0x2000, scoped, tag = 'output window, operand 0, single buffered']
    %8 = vsyncpa [#allocation3], 0
    %9 = vsyncpa [#allocation6], 0
    %10 = vsyncpa [#allocation4], 0
    // Predicated region
    $region2: #{tpu_custom_call.1} parent=1 // pred_check
      _
    $region3: #{tpu_custom_call.1} parent=1 // pred_check_branch
      %12 = sbr.rel (0) target = $region5
    $region4: #{tpu_custom_call.1} parent=1 // pred_region
      %14 = vsyncadd [#allocation3], 0
      %s15 = sshll.u32 %s0, 4
      %s16 = int_to_ptr.hbm [resolvable:$true] %s15
      %s17 = sshll.u32 [#allocation2], 4
      %s18 = int_to_ptr.vmem [resolvable:$true] %s17
      %23 = dma.hbm_to_vmem [thread:$0]  %s16, 256, %s18, [#allocation3], 128, 128, 8
    $region5: #{tpu_custom_call.1} parent=1 // pred_fallthru
      _
    // Predicated region
    $region6: #{tpu_custom_call.1} parent=1 // pred_check
      _
    $region7: #{tpu_custom_call.1} parent=1 // pred_check_branch
      %25 = sbr.rel (0) target = $region9
    $region8: #{tpu_custom_call.1} parent=1 // pred_region
      %27 = vsyncadd [#allocation6], 0
      %s28 = sshll.u32 %s1, 4
      %s29 = int_to_ptr.hbm [resolvable:$true] %s28
      %s30 = sshll.u32 [#allocation5], 4
      %s31 = int_to_ptr.vmem [resolvable:$true] %s30
      %36 = dma.hbm_to_vmem [thread:$0]  %s29, 4096, %s31, [#allocation6], 128, 128, 8
    $region9: #{tpu_custom_call.1} parent=1 // pred_fallthru
      _
    // Predicated region
    $region10: #{tpu_custom_call.1} parent=1 // pred_check
      _
    $region11: #{tpu_custom_call.1} parent=1 // pred_check_branch
      %38 = sbr.rel (0) target = $region13
    $region12: #{tpu_custom_call.1} parent=1 // pred_region
      %40 = vsyncadd [#allocation6], 0
      %s41 = sshll.u32 %s2, 4
      %s42 = int_to_ptr.hbm [resolvable:$true] %s41
      %s43 = sshll.u32 [#allocation7], 4
      %s44 = int_to_ptr.vmem [resolvable:$true] %s43
      %49 = dma.hbm_to_vmem [thread:$0]  %s42, 32, %s44, [#allocation6], 16, 16, 1
    $region13: #{tpu_custom_call.1} parent=1 // pred_fallthru
      _
    // Predicated region
    $region14: #{tpu_custom_call.1} parent=1 // pred_check
      _
    $region15: #{tpu_custom_call.1} parent=1 // pred_check_branch
      %51 = sbr.rel (0) target = $region17
    $region16: #{tpu_custom_call.1} parent=1 // pred_region
      %53 = dma.done [#allocation3], 256
    $region17: #{tpu_custom_call.1} parent=1 // pred_fallthru
      _
    // Predicated region
    $region18: #{tpu_custom_call.1} parent=1 // pred_check
      _
    $region19: #{tpu_custom_call.1} parent=1 // pred_check_branch
      %55 = sbr.rel (0) target = $region21
    $region20: #{tpu_custom_call.1} parent=1 // pred_region
      %57 = dma.done [#allocation6], 4096
    $region21: #{tpu_custom_call.1} parent=1 // pred_fallthru
      _
    // Predicated region
    $region22: #{tpu_custom_call.1} parent=1 // pred_check
      _
    $region23: #{tpu_custom_call.1} parent=1 // pred_check_branch
      %59 = sbr.rel (0) target = $region25
    $region24: #{tpu_custom_call.1} parent=1 // pred_region
      %61 = dma.done [#allocation6], 32
    $region25: #{tpu_custom_call.1} parent=1 // pred_fallthru
      _
    %v62 = vld [vmem:[#allocation2] sm:$0xff]
    %v63 = vld [vmem:[#allocation2 + $0x8] sm:$0xff]
    %v64 = vld [vmem:[#allocation5] sm:$0xff]
    %v65 = vld [vmem:[#allocation5 + $0x8] sm:$0xff]
    %v66 = vld [vmem:[#allocation5 + $0x10] sm:$0xff]
    %v67 = vld [vmem:[#allocation5 + $0x18] sm:$0xff]
    %v68 = vld [vmem:[#allocation5 + $0x20] sm:$0xff]
    %v69 = vld [vmem:[#allocation5 + $0x28] sm:$0xff]
    %v70 = vld [vmem:[#allocation5 + $0x30] sm:$0xff]
    %v71 = vld [vmem:[#allocation5 + $0x38] sm:$0xff]
    %v72 = vld [vmem:[#allocation5 + $0x40] sm:$0xff]
    %v73 = vld [vmem:[#allocation5 + $0x48] sm:$0xff]
    %v74 = vld [vmem:[#allocation5 + $0x50] sm:$0xff]
    %v75 = vld [vmem:[#allocation5 + $0x58] sm:$0xff]
    %v76 = vld [vmem:[#allocation5 + $0x60] sm:$0xff]
    %v77 = vld [vmem:[#allocation5 + $0x68] sm:$0xff]
    %v78 = vld [vmem:[#allocation5 + $0x70] sm:$0xff]
    %v79 = vld [vmem:[#allocation5 + $0x78] sm:$0xff]
    %v80 = vld [vmem:[#allocation7] sm:$0x1]
    %v82 = vperm.slane %v80, 0
    %84 = vmatpush.msra.mxu0 %v79
    %85 = vmatpush.msra.mxu0 %v78
    %86 = vmatpush.msra.mxu0 %v77
    %87 = vmatpush.msra.mxu0 %v76
    %88 = vmatpush.msra.mxu0 %v75
    %89 = vmatpush.msra.mxu0 %v74
    %90 = vmatpush.msra.mxu0 %v73
    %91 = vmatpush.msra.mxu0 %v72
    %92 = vmatpush.msra.mxu0 %v71
    %93 = vmatpush.msra.mxu0 %v70
    %94 = vmatpush.msra.mxu0 %v69
    %95 = vmatpush.msra.mxu0 %v68
    %96 = vmatpush.msra.mxu0 %v67
    %97 = vmatpush.msra.mxu0 %v66
    %98 = vmatpush.msra.mxu0 %v65
    %99 = vmatpush.msra.mxu0 %v64
    %100 = vmatmul.f32.gmra.mxu0 %v62
    %v101 = vpop.f32.mrf.mxu0
    %v102 = vadd.f32 %v82, %v101
    %103 = vmatmul.f32.gmra.mxu0 %v63
    %v104 = vpop.f32.mrf.mxu0
    %v105 = vadd.f32 %v82, %v104
    %106 = vdwg.mxu0
    %v107 = vmax.f32 %v102, 0.0
    %v108 = vmax.f32 %v105, 0.0
    %s109 = scalar_lea.vmem [#allocation5], 128
    %v110 = vld [vmem:[%s109] sm:$0xff]
    %v111 = vld [vmem:[%s109 + $0x8] sm:$0xff]
    %v112 = vld [vmem:[%s109 + $0x10] sm:$0xff]
    %v113 = vld [vmem:[%s109 + $0x18] sm:$0xff]
    %v114 = vld [vmem:[%s109 + $0x20] sm:$0xff]
    %v115 = vld [vmem:[%s109 + $0x28] sm:$0xff]
    %v116 = vld [vmem:[%s109 + $0x30] sm:$0xff]
    %v117 = vld [vmem:[%s109 + $0x38] sm:$0xff]
    %v118 = vld [vmem:[%s109 + $0x40] sm:$0xff]
    %v119 = vld [vmem:[%s109 + $0x48] sm:$0xff]
    %v120 = vld [vmem:[%s109 + $0x50] sm:$0xff]
    %v121 = vld [vmem:[%s109 + $0x58] sm:$0xff]
    %v122 = vld [vmem:[%s109 + $0x60] sm:$0xff]
    %v123 = vld [vmem:[%s109 + $0x68] sm:$0xff]
    %v124 = vld [vmem:[%s109 + $0x70] sm:$0xff]
    %v125 = vld [vmem:[%s109 + $0x78] sm:$0xff]
    %s126 = scalar_lea.vmem [#allocation7], 1
    %v127 = vld [vmem:[%s126] sm:$0x1]
    %v129 = vperm.slane %v127, 0
    %131 = vmatpush.msra.mxu0 %v125
    %132 = vmatpush.msra.mxu0 %v124
    %133 = vmatpush.msra.mxu0 %v123
    %134 = vmatpush.msra.mxu0 %v122
    %135 = vmatpush.msra.mxu0 %v121
    %136 = vmatpush.msra.mxu0 %v120
    %137 = vmatpush.msra.mxu0 %v119
    %138 = vmatpush.msra.mxu0 %v118
    %139 = vmatpush.msra.mxu0 %v117
    %140 = vmatpush.msra.mxu0 %v116
    %141 = vmatpush.msra.mxu0 %v115
    %142 = vmatpush.msra.mxu0 %v114
    %143 = vmatpush.msra.mxu0 %v113
    %144 = vmatpush.msra.mxu0 %v112
    %145 = vmatpush.msra.mxu0 %v111
    %146 = vmatpush.msra.mxu0 %v110
    %147 = vmatmul.f32.gmra.mxu0 %v62
    %v148 = vpop.f32.mrf.mxu0
    %v149 = vadd.f32 %v129, %v148
    %150 = vmatmul.f32.gmra.mxu0 %v63
    %v151 = vpop.f32.mrf.mxu0
    %v152 = vadd.f32 %v129, %v151
    %153 = vdwg.mxu0
    %v154 = vxor.u32 %v149, 2147483648
    %v155 = vxor.u32 %v152, 2147483648
    %v156 = vmul.f32 %v154, 1.442695
    %v157 = vpow.pop %v156
    %v158 = vmul.f32 %v155, 1.442695
    %v159 = vpow.pop %v158
    %v160 = vadd.f32 %v157, 1.0
    %v161 = vadd.f32 %v159, 1.0
    %v162 = vrcp.pop %v160
    %v163 = vmul.f32 %v160, %v162
    %v164 = vsub.f32 1.0, %v163
    %v165 = vmul.f32 %v162, %v164
    %v166 = vadd.f32 %v162, %v165
    %vm167 = vweird.f32 %v160
    %vm168 = vweird.f32 %v162
    %vm169 = vmor %vm167, %vm168
    %v170 = vsel %vm169, %v162, %v166
    %v171 = vand.u32 2147483647, %v160
    %vm172 = vcmp.eq.f32.partialorder %v171, 8.507059e+37
    %v173 = vand.u32 %v160, 2147483648
    %v174 = vor.u32 1.1754944e-38, %v173
    %v175 = vsel %vm172, %v174, %v170
    %v176 = vmul.f32 1.0, %v175
    %v177 = vrcp.pop %v161
    %v178 = vmul.f32 %v161, %v177
    %v179 = vsub.f32 1.0, %v178
    %v180 = vmul.f32 %v177, %v179
    %v181 = vadd.f32 %v177, %v180
    %vm182 = vweird.f32 %v161
    %vm183 = vweird.f32 %v177
    %vm184 = vmor %vm182, %vm183
    %v185 = vsel %vm184, %v177, %v181
    %v186 = vand.u32 2147483647, %v161
    %vm187 = vcmp.eq.f32.partialorder %v186, 8.507059e+37
    %v188 = vand.u32 %v161, 2147483648
    %v189 = vor.u32 1.1754944e-38, %v188
    %v190 = vsel %vm187, %v189, %v185
    %v191 = vmul.f32 1.0, %v190
    %v192 = vsub.f32 %v107, %v62
    %v193 = vsub.f32 %v108, %v63
    %v194 = vmul.f32 %v176, %v192
    %v195 = vmul.f32 %v191, %v193
    %v196 = vadd.f32 %v62, %v194
    %v197 = vadd.f32 %v63, %v195
    %198 = vst [vmem:[#allocation8] sm:$0xff] %v196
    %199 = vst [vmem:[#allocation8 + $0x8] sm:$0xff] %v197
    // Predicated region
    $region26: #{tpu_custom_call.1} parent=1 // pred_check
      _
    $region27: #{tpu_custom_call.1} parent=1 // pred_check_branch
      %201 = sbr.rel (0) target = $region29
    $region28: #{tpu_custom_call.1} parent=1 // pred_region
      %203 = vsyncadd [#allocation4], 0
      %s204 = sshll.u32 [#allocation8], 4
      %s205 = int_to_ptr.vmem [resolvable:$true] %s204
      %s206 = sshll.u32 %s3, 4
      %s207 = int_to_ptr.hbm [resolvable:$true] %s206
      %212 = dma.vmem_to_hbm [thread:$0]  %s205, 256, %s207, [#allocation4], 128, 128, 8
    $region29: #{tpu_custom_call.1} parent=1 // pred_fallthru
      _
    // Predicated region
    $region30: #{tpu_custom_call.1} parent=1 // pred_check
      _
    $region31: #{tpu_custom_call.1} parent=1 // pred_check_branch
      %214 = sbr.rel (0) target = $region33
    $region32: #{tpu_custom_call.1} parent=1 // pred_region
      %216 = dma.done [#allocation4], 256
    $region33: #{tpu_custom_call.1} parent=1 // pred_fallthru
      _
    %217 = vsyncpa [#allocation3], 1
    %218 = vsyncpa [#allocation6], 1
    %219 = vsyncpa [#allocation4], 1

// kernel: tpu_custom_call.1
$region0: #{tpu_custom_call.1}
  #allocation0 [shape = 'u32[]', space=smem, size = 0x4, offset = 0x4, fixed_abs, tag = 'smem constant byte address 0x4 - core index']
  #allocation1 [shape = 'u32[72,128]{1,0:T(1,128)}', space=vmem, size = 0x9000, scoped, tag = 'internal scratch']
  %s0 = inlined_call_operand.hbm [shape: f32[16,128], index: 0, kind: input, shape index: {}]
  %s1 = inlined_call_operand.hbm [shape: f32[2,128,128], index: 1, kind: input, shape index: {}]
  %s2 = inlined_call_operand.hbm [shape: f32[2,1,128], index: 2, kind: input, shape index: {}]
  %s3 = inlined_call_operand.hbm [shape: f32[16,128], index: 3, kind: output, shape index: {}]
  %s4 = sld [smem:[#allocation0]]
  $region34: #{tpu_custom_call.1} parent=0
    _
  %s6 = ssub.s32 1, %s4
  %s7 = scalar_select 0, %s6, %s4
  $region1: #{tpu_custom_call.1} parent=0
    #allocation2 [shape = 'u8[8192]{0}', space=vmem, size = 0x2000, scoped, tag = 'input window, operand 0, single buffered']
    #allocation3 [shape = 's32[1]{0}', space=sflag, size = 0x4, scoped, tag = 'scoped memory for tpu_custom_call.1']
    #allocation4 [shape = 's32[1]{0}', space=sflag, size = 0x4, scoped, tag = 'scoped memory for tpu_custom_call.1']
    #allocation5 [shape = 'u8[131072]{0}', space=vmem, size = 0x20000, scoped, tag = 'input window, operand 1, single buffered']
    #allocation6 [shape = 's32[1]{0}', space=sflag, size = 0x4, scoped, tag = 'scoped memory for tpu_custom_call.1']
    #allocation7 [shape = 'u8[1024]{0}', space=vmem, size = 0x400, scoped, tag = 'input window, operand 2, single buffered']
    #allocation8 [shape = 'u8[8192]{0}', space=vmem, size = 0x2000, scoped, tag = 'output window, operand 0, single buffered']
    %8 = vsyncpa [#allocation3], 0
    %9 = vsyncpa [#allocation6], 0
    %10 = vsyncpa [#allocation4], 0
    // Predicated region
    $region2: #{tpu_custom_call.1} parent=1 // pred_check
      _
    $region3: #{tpu_custom_call.1} parent=1 // pred_check_branch
      %12 = sbr.rel (0) target = $region5
    $region4: #{tpu_custom_call.1} parent=1 // pred_region
      %14 = vsyncadd [#allocation3], 0
      %s15 = sshll.u32 %s0, 4
      %s16 = int_to_ptr.hbm [resolvable:$true] %s15
      %s17 = sshll.u32 [#allocation2], 4
      %s18 = int_to_ptr.vmem [resolvable:$true] %s17
      %23 = dma.hbm_to_vmem [thread:$0]  %s16, 256, %s18, [#allocation3], 128, 128, 8
    $region5: #{tpu_custom_call.1} parent=1 // pred_fallthru
      _
    // Predicated region
    $region6: #{tpu_custom_call.1} parent=1 // pred_check
      _
    $region7: #{tpu_custom_call.1} parent=1 // pred_check_branch
      %25 = sbr.rel (0) target = $region9
    $region8: #{tpu_custom_call.1} parent=1 // pred_region
      %27 = vsyncadd [#allocation6], 0
      %s28 = sshll.u32 %s1, 4
      %s29 = int_to_ptr.hbm [resolvable:$true] %s28
      %s30 = sshll.u32 [#allocation5], 4
      %s31 = int_to_ptr.vmem [resolvable:$true] %s30
      %36 = dma.hbm_to_vmem [thread:$0]  %s29, 4096, %s31, [#allocation6], 128, 128, 8
    $region9: #{tpu_custom_call.1} parent=1 // pred_fallthru
      _
    // Predicated region
    $region10: #{tpu_custom_call.1} parent=1 // pred_check
      _
    $region11: #{tpu_custom_call.1} parent=1 // pred_check_branch
      %38 = sbr.rel (0) target = $region13
    $region12: #{tpu_custom_call.1} parent=1 // pred_region
      %40 = vsyncadd [#allocation6], 0
      %s41 = sshll.u32 %s2, 4
      %s42 = int_to_ptr.hbm [resolvable:$true] %s41
      %s43 = sshll.u32 [#allocation7], 4
      %s44 = int_to_ptr.vmem [resolvable:$true] %s43
      %49 = dma.hbm_to_vmem [thread:$0]  %s42, 32, %s44, [#allocation6], 16, 16, 1
    $region13: #{tpu_custom_call.1} parent=1 // pred_fallthru
      _
    // Predicated region
    $region14: #{tpu_custom_call.1} parent=1 // pred_check
      _
    $region15: #{tpu_custom_call.1} parent=1 // pred_check_branch
      %51 = sbr.rel (0) target = $region17
    $region16: #{tpu_custom_call.1} parent=1 // pred_region
      %53 = dma.done [#allocation3], 256
    $region17: #{tpu_custom_call.1} parent=1 // pred_fallthru
      _
    // Predicated region
    $region18: #{tpu_custom_call.1} parent=1 // pred_check
      _
    $region19: #{tpu_custom_call.1} parent=1 // pred_check_branch
      %55 = sbr.rel (0) target = $region21
    $region20: #{tpu_custom_call.1} parent=1 // pred_region
      %57 = dma.done [#allocation6], 4096
    $region21: #{tpu_custom_call.1} parent=1 // pred_fallthru
      _
    // Predicated region
    $region22: #{tpu_custom_call.1} parent=1 // pred_check
      _
    $region23: #{tpu_custom_call.1} parent=1 // pred_check_branch
      %59 = sbr.rel (0) target = $region25
    $region24: #{tpu_custom_call.1} parent=1 // pred_region
      %61 = dma.done [#allocation6], 32
    $region25: #{tpu_custom_call.1} parent=1 // pred_fallthru
      _
    %v62 = vld [vmem:[#allocation2] sm:$0xff]
    %v63 = vld [vmem:[#allocation2 + $0x8] sm:$0xff]
    %v64 = vld [vmem:[#allocation5] sm:$0xff]
    %v65 = vld [vmem:[#allocation5 + $0x8] sm:$0xff]
    %v66 = vld [vmem:[#allocation5 + $0x10] sm:$0xff]
    %v67 = vld [vmem:[#allocation5 + $0x18] sm:$0xff]
    %v68 = vld [vmem:[#allocation5 + $0x20] sm:$0xff]
    %v69 = vld [vmem:[#allocation5 + $0x28] sm:$0xff]
    %v70 = vld [vmem:[#allocation5 + $0x30] sm:$0xff]
    %v71 = vld [vmem:[#allocation5 + $0x38] sm:$0xff]
    %v72 = vld [vmem:[#allocation5 + $0x40] sm:$0xff]
    %v73 = vld [vmem:[#allocation5 + $0x48] sm:$0xff]
    %v74 = vld [vmem:[#allocation5 + $0x50] sm:$0xff]
    %v75 = vld [vmem:[#allocation5 + $0x58] sm:$0xff]
    %v76 = vld [vmem:[#allocation5 + $0x60] sm:$0xff]
    %v77 = vld [vmem:[#allocation5 + $0x68] sm:$0xff]
    %v78 = vld [vmem:[#allocation5 + $0x70] sm:$0xff]
    %v79 = vld [vmem:[#allocation5 + $0x78] sm:$0xff]
    %v80 = vld [vmem:[#allocation7] sm:$0x1]
    %v82 = vperm.slane %v80, 0
    %84 = vmatpush.msra.mxu0 %v79
    %85 = vmatpush.msra.mxu0 %v78
    %86 = vmatpush.msra.mxu0 %v77
    %87 = vmatpush.msra.mxu0 %v76
    %88 = vmatpush.msra.mxu0 %v75
    %89 = vmatpush.msra.mxu0 %v74
    %90 = vmatpush.msra.mxu0 %v73
    %91 = vmatpush.msra.mxu0 %v72
    %92 = vmatpush.msra.mxu0 %v71
    %93 = vmatpush.msra.mxu0 %v70
    %94 = vmatpush.msra.mxu0 %v69
    %95 = vmatpush.msra.mxu0 %v68
    %96 = vmatpush.msra.mxu0 %v67
    %97 = vmatpush.msra.mxu0 %v66
    %98 = vmatpush.msra.mxu0 %v65
    %99 = vmatpush.msra.mxu0 %v64
    %100 = vmatmul.f32.gmra.mxu0 %v62
    %v101 = vpop.f32.mrf.mxu0
    %v102 = vadd.f32 %v82, %v101
    %103 = vmatmul.f32.gmra.mxu0 %v63
    %v104 = vpop.f32.mrf.mxu0
    %v105 = vadd.f32 %v82, %v104
    %106 = vdwg.mxu0
    %v107 = vmax.f32 %v102, 0.0
    %v108 = vmax.f32 %v105, 0.0
    %s109 = scalar_lea.vmem [#allocation5], 128
    %v110 = vld [vmem:[%s109] sm:$0xff]
    %v111 = vld [vmem:[%s109 + $0x8] sm:$0xff]
    %v112 = vld [vmem:[%s109 + $0x10] sm:$0xff]
    %v113 = vld [vmem:[%s109 + $0x18] sm:$0xff]
    %v114 = vld [vmem:[%s109 + $0x20] sm:$0xff]
    %v115 = vld [vmem:[%s109 + $0x28] sm:$0xff]
    %v116 = vld [vmem:[%s109 + $0x30] sm:$0xff]
    %v117 = vld [vmem:[%s109 + $0x38] sm:$0xff]
    %v118 = vld [vmem:[%s109 + $0x40] sm:$0xff]
    %v119 = vld [vmem:[%s109 + $0x48] sm:$0xff]
    %v120 = vld [vmem:[%s109 + $0x50] sm:$0xff]
    %v121 = vld [vmem:[%s109 + $0x58] sm:$0xff]
    %v122 = vld [vmem:[%s109 + $0x60] sm:$0xff]
    %v123 = vld [vmem:[%s109 + $0x68] sm:$0xff]
    %v124 = vld [vmem:[%s109 + $0x70] sm:$0xff]
    %v125 = vld [vmem:[%s109 + $0x78] sm:$0xff]
    %s126 = scalar_lea.vmem [#allocation7], 1
    %v127 = vld [vmem:[%s126] sm:$0x1]
    %v129 = vperm.slane %v127, 0
    %131 = vmatpush.msra.mxu0 %v125
    %132 = vmatpush.msra.mxu0 %v124
    %133 = vmatpush.msra.mxu0 %v123
    %134 = vmatpush.msra.mxu0 %v122
    %135 = vmatpush.msra.mxu0 %v121
    %136 = vmatpush.msra.mxu0 %v120
    %137 = vmatpush.msra.mxu0 %v119
    %138 = vmatpush.msra.mxu0 %v118
    %139 = vmatpush.msra.mxu0 %v117
    %140 = vmatpush.msra.mxu0 %v116
    %141 = vmatpush.msra.mxu0 %v115
    %142 = vmatpush.msra.mxu0 %v114
    %143 = vmatpush.msra.mxu0 %v113
    %144 = vmatpush.msra.mxu0 %v112
    %145 = vmatpush.msra.mxu0 %v111
    %146 = vmatpush.msra.mxu0 %v110
    %147 = vmatmul.f32.gmra.mxu0 %v62
    %v148 = vpop.f32.mrf.mxu0
    %v149 = vadd.f32 %v129, %v148
    %150 = vmatmul.f32.gmra.mxu0 %v63
    %v151 = vpop.f32.mrf.mxu0
    %v152 = vadd.f32 %v129, %v151
    %153 = vdwg.mxu0
    %v154 = vxor.u32 %v149, 2147483648
    %v155 = vxor.u32 %v152, 2147483648
    %v156 = vmul.f32 %v154, 1.442695
    %v157 = vpow.pop %v156
    %v158 = vmul.f32 %v155, 1.442695
    %v159 = vpow.pop %v158
    %v160 = vadd.f32 %v157, 1.0
    %v161 = vadd.f32 %v159, 1.0
    %v162 = vrcp.pop %v160
    %v163 = vmul.f32 %v160, %v162
    %v164 = vsub.f32 1.0, %v163
    %v165 = vmul.f32 %v162, %v164
    %v166 = vadd.f32 %v162, %v165
    %vm167 = vweird.f32 %v160
    %vm168 = vweird.f32 %v162
    %vm169 = vmor %vm167, %vm168
    %v170 = vsel %vm169, %v162, %v166
    %v171 = vand.u32 2147483647, %v160
    %vm172 = vcmp.eq.f32.partialorder %v171, 8.507059e+37
    %v173 = vand.u32 %v160, 2147483648
    %v174 = vor.u32 1.1754944e-38, %v173
    %v175 = vsel %vm172, %v174, %v170
    %v176 = vmul.f32 1.0, %v175
    %v177 = vrcp.pop %v161
    %v178 = vmul.f32 %v161, %v177
    %v179 = vsub.f32 1.0, %v178
    %v180 = vmul.f32 %v177, %v179
    %v181 = vadd.f32 %v177, %v180
    %vm182 = vweird.f32 %v161
    %vm183 = vweird.f32 %v177
    %vm184 = vmor %vm182, %vm183
    %v185 = vsel %vm184, %v177, %v181
    %v186 = vand.u32 2147483647, %v161
    %vm187 = vcmp.eq.f32.partialorder %v186, 8.507059e+37
    %v188 = vand.u32 %v161, 2147483648
    %v189 = vor.u32 1.1754944e-38, %v188
    %v190 = vsel %vm187, %v189, %v185
    %v191 = vmul.f32 1.0, %v190
    %v192 = vsub.f32 %v107, %v62
    %v193 = vsub.f32 %v108, %v63
    %v194 = vmul.f32 %v176, %v192
    %v195 = vmul.f32 %v191, %v193
    %v196 = vadd.f32 %v62, %v194
    %v197 = vadd.f32 %v63, %v195
    %198 = vst [vmem:[#allocation8] sm:$0xff] %v196
    %199 = vst [vmem:[#allocation8 + $0x8] sm:$0xff] %v197
    // Predicated region
    $region26: #{tpu_custom_call.1} parent=1 // pred_check
      _
    $region27: #{tpu_custom_call.1} parent=1 // pred_check_branch
      %201 = sbr.rel (0) target = $region29
    $region28: #{tpu_custom_call.1} parent=1 // pred_region
      %203 = vsyncadd [#allocation4], 0
      %s204 = sshll.u32 [#allocation8], 4
      %s205 = int_to_ptr.vmem [resolvable:$true] %s204
      %s206 = sshll.u32 %s3, 4
      %s207 = int_to_ptr.hbm [resolvable:$true] %s206
      %212 = dma.vmem_to_hbm [thread:$0]  %s205, 256, %s207, [#allocation4], 128, 128, 8
    $region29: #{tpu_custom_call.1} parent=1 // pred_fallthru
      _
    // Predicated region
    $region30: #{tpu_custom_call.1} parent=1 // pred_check
      _
    $region31: #{tpu_custom_call.1} parent=1 // pred_check_branch
      %214 = sbr.rel (0) target = $region33
    $region32: #{tpu_custom_call.1} parent=1 // pred_region
      %216 = dma.done [#allocation4], 256
    $region33: #{tpu_custom_call.1} parent=1 // pred_fallthru
      _
    %217 = vsyncpa [#allocation3], 1
    %218 = vsyncpa [#allocation6], 1
    %219 = vsyncpa [#allocation4], 1

</llo_original>
